<compile_context>
chip_gen: v7x
topology: tpu7x:2x2x1
jax: 0.10.0
libtpu: 0.0.40
codegen_flags: <defaults>
</compile_context>

<pallas_src>
import jax
import jax.numpy as jnp
from jax.experimental import pallas as pl
from jax.experimental.pallas import tpu as pltpu

LANES = 128            # vreg lane width (last dim must be a multiple of this)
SUBLANES = 8           # f32 vreg sublane count (second-to-last dim multiple)
MAX_BLOCK_ROWS = 2048  # 2048x128 f32 tile = 1 MiB; ~4 MiB with in+out double buffering
SMALL_N = 8192         # below 32 KiB of f32, plain jnp beats the kernel launch cost


def linreg_kernel(w_ref, b_ref, x_ref, o_ref):
    # w_ref, b_ref: (1,) scalars in SMEM; x_ref / o_ref: (block_rows, 128) VMEM tiles.
    o_ref[...] = w_ref[0] * x_ref[...] + b_ref[0]


def _round_up(v, m):
    return ((v + m - 1) // m) * m


def linear_regression(x, weights, bias):
    """y = weights * x + bias, elementwise, for any-shaped x."""
    weights = jnp.asarray(weights, dtype=x.dtype).reshape(1)
    bias = jnp.asarray(bias, dtype=x.dtype).reshape(1)

    orig_shape = x.shape
    n = x.size

    # Fast path: tiny inputs (launch cost dominates) and non-f32 dtypes
    # (the SUBLANES=8 tiling below is f32-specific).
    if n < SMALL_N or x.dtype != jnp.float32:
        return (weights * x.reshape(-1) + bias).reshape(orig_shape).astype(x.dtype)

    flat = x.reshape(-1)

    # Lane-dense (rows, 128) slab so stores lower to unmasked, dense vst.
    # Pad only up to a multiple of 128; the ragged last *grid block* is handled
    # by Pallas (OOB writes dropped), so no pad-to-block-multiple is required.
    rows = pl.cdiv(n, LANES)
    padded_n = rows * LANES
    if padded_n != n:
        flat = jnp.pad(flat, (0, padded_n - n))
    slab = flat.reshape(rows, LANES)

    # Row-tile choice: large tiles amortize per-grid-step overhead, but keep at
    # least 2 grid steps so both v7x TensorCores get work via the "parallel"
    # dimension semantics.
    if rows > MAX_BLOCK_ROWS:
        block_rows = MAX_BLOCK_ROWS
    else:
        block_rows = max(SUBLANES, _round_up(pl.cdiv(rows, 2), SUBLANES))
    grid = (pl.cdiv(rows, block_rows),)

    out = pl.pallas_call(
        linreg_kernel,
        out_shape=jax.ShapeDtypeStruct((rows, LANES), x.dtype),
        grid=grid,
        in_specs=[
            pl.BlockSpec(memory_space=pltpu.MemorySpace.SMEM),    # weights (1,)
            pl.BlockSpec(memory_space=pltpu.MemorySpace.SMEM),    # bias    (1,)
            pl.BlockSpec((block_rows, LANES), lambda i: (i, 0)),  # x row tile
        ],
        out_specs=pl.BlockSpec((block_rows, LANES), lambda i: (i, 0)),
        compiler_params=pltpu.CompilerParams(
            dimension_semantics=("parallel",),
        ),
        cost_estimate=pl.CostEstimate(
            flops=2 * padded_n, bytes_accessed=8 * padded_n, transcendentals=0),
    )(weights, bias, slab)

    if padded_n != n:
        return out.reshape(-1)[:n].reshape(orig_shape)
    return out.reshape(orig_shape)


if __name__ == "__main__":
    key = jax.random.PRNGKey(0)
    kw, kb, k1, k2, k3 = jax.random.split(key, 5)

    # Deterministic parameter init (same shapes as torch.randn(1) in __init__).
    weights = jax.random.normal(kw, (1,), dtype=jnp.float32)
    bias = jax.random.normal(kb, (1,), dtype=jnp.float32)

    # Tutorial-sized (N, 1) input: exercises the small-input jnp fast path.
    x_small = jax.random.normal(k1, (8, 1), dtype=jnp.float32)
    y_small = linear_regression(x_small, weights, bias)
    jax.block_until_ready(y_small)
    assert y_small.shape == x_small.shape and y_small.dtype == x_small.dtype
    assert jnp.allclose(y_small, weights * x_small + bias, atol=1e-6), "mismatch (8,1)"

    # Lane-aligned input: Pallas path, no pad/slice, ragged last grid block
    # (520 rows tiled as 264-row blocks -> 2 grid steps).
    x_mid = jax.random.normal(k2, (512, 130), dtype=jnp.float32)
    y_mid = linear_regression(x_mid, weights, bias)
    jax.block_until_ready(y_mid)
    assert y_mid.shape == x_mid.shape and y_mid.dtype == x_mid.dtype
    assert jnp.allclose(y_mid, weights * x_mid + bias, atol=1e-6), "mismatch (512,130)"

    # Odd-sized input: Pallas path with the pad-to-128 + tail-slice fallback.
    x_odd = jax.random.normal(k3, (123, 97), dtype=jnp.float32)
    y_odd = linear_regression(x_odd, weights, bias)
    jax.block_until_ready(y_odd)
    assert y_odd.shape == x_odd.shape and y_odd.dtype == x_odd.dtype
    assert jnp.allclose(y_odd, weights * x_odd + bias, atol=1e-6), "mismatch (123,97)"

    print("KERNEL_OK")
</pallas_src>

<mosaic_0001>
module attributes {stable_mosaic.version = 11 : i64} {
  func.func @linreg_kernel(%arg0: i32, %arg1: memref<1xf32, #tpu.memory_space<smem>>, %arg2: memref<1xf32, #tpu.memory_space<smem>>, %arg3: memref<264x128xf32, #tpu.memory_space<vmem>>, %arg4: memref<264x128xf32, #tpu.memory_space<vmem>>) attributes {dimension_semantics = [#tpu.dimension_semantics<parallel>], iteration_bounds = array<i64: 2>, scalar_prefetch = 0 : i64, scratch_operands = 0 : i64, tpu.core_type = #tpu.core_type<tc>, window_params = [{transform_indices = @transform_0, window_bounds = array<i64: 1>}, {transform_indices = @transform_1, window_bounds = array<i64: 1>}, {transform_indices = @transform_2, window_bounds = array<i64: 264, 128>}, {transform_indices = @transform_3, window_bounds = array<i64: 264, 128>}]} {
    %c0 = arith.constant 0 : index
    %0 = memref.load %arg1[%c0] : memref<1xf32, #tpu.memory_space<smem>>
    %c0_0 = arith.constant 0 : index
    %c0_1 = arith.constant 0 : index
    %1 = vector.load %arg3[%c0_0, %c0_1] : memref<264x128xf32, #tpu.memory_space<vmem>>, vector<264x128xf32>
    %2 = vector.broadcast %0 : f32 to vector<264x128xf32>
    %3 = arith.mulf %2, %1 : vector<264x128xf32>
    %c0_2 = arith.constant 0 : index
    %4 = memref.load %arg2[%c0_2] : memref<1xf32, #tpu.memory_space<smem>>
    %5 = vector.broadcast %4 : f32 to vector<264x128xf32>
    %6 = arith.addf %3, %5 : vector<264x128xf32>
    %c0_3 = arith.constant 0 : index
    %c0_4 = arith.constant 0 : index
    %7 = vector.load %arg4[%c0_3, %c0_4] : memref<264x128xf32, #tpu.memory_space<vmem>>, vector<264x128xf32>
    tpu.vector_store %arg4[%c0_3, %c0_4], %6 {strides = array<i32>} : memref<264x128xf32, #tpu.memory_space<vmem>>, vector<264x128xf32>,
    return
  }
  func.func @transform_0(%arg0: i32) -> i32 {
    %c0_i32 = arith.constant 0 : i32
    %c0_i32_0 = arith.constant 0 : i32
    return %c0_i32 : i32
  }
  func.func @transform_1(%arg0: i32) -> i32 {
    %c0_i32 = arith.constant 0 : i32
    %c0_i32_0 = arith.constant 0 : i32
    return %c0_i32 : i32
  }
  func.func @transform_2(%arg0: i32) -> (i32, i32) {
    %c0_i32 = arith.constant 0 : i32
    %c0_i32_0 = arith.constant 0 : i32
    return %arg0, %c0_i32 : i32, i32
  }
  func.func @transform_3(%arg0: i32) -> (i32, i32) {
    %c0_i32 = arith.constant 0 : i32
    %c0_i32_0 = arith.constant 0 : i32
    return %arg0, %c0_i32 : i32, i32
  }
}

</mosaic_0001>

<llo_original>
// kernel: tpu_custom_call.1
$region0: #{tpu_custom_call.1}
  #allocation0 [shape = 'u32[]', space=smem, size = 0x4, offset = 0x4, fixed_abs, tag = 'smem constant byte address 0x4 - core index']
  #allocation1 [shape = 'u32[144,128]{1,0:T(1,128)}', space=vmem, size = 0x12000, scoped, tag = 'internal scratch']
  #allocation2 [shape = 'f32[1]{0:T(128)S(6)}', space=smem, size = 0x200, scoped, tag = 'scoped memory for tpu_custom_call.1']
  #allocation3 [shape = 'f32[1]{0:T(128)S(6)}', space=smem, size = 0x200, scoped, tag = 'scoped memory for tpu_custom_call.1']
  %s0 = inlined_call_operand.<no memory space> [shape: f32[1], index: 0, kind: input, shape index: {}]
  %s1 = inlined_call_operand.<no memory space> [shape: f32[1], index: 1, kind: input, shape index: {}]
  %s2 = inlined_call_operand.hbm [shape: f32[520,128], index: 2, kind: input, shape index: {}]
  %s3 = inlined_call_operand.hbm [shape: f32[520,128], index: 3, kind: output, shape index: {}]
  %s4 = sld [smem:[#allocation0]]
  $region49: #{tpu_custom_call.1} parent=0
    _
  %s6 = ssub.s32 1, %s4
  %s7 = scalar_select 0, %s6, %s4
  %8 = sst [smem:[#allocation2]] %s0
  %9 = sst [smem:[#allocation3]] %s1
  $region1: #{tpu_custom_call.1} parent=0
    #allocation4 [shape = 'u8[270336]{0}', space=vmem, size = 0x42000, scoped, tag = 'input window, operand 2']
    #allocation5 [shape = 's32[2]{0}', space=sflag, size = 0x8, scoped, tag = 'scoped memory for tpu_custom_call.1']
    #allocation6 [shape = 's32[2]{0}', space=sflag, size = 0x8, scoped, tag = 'scoped memory for tpu_custom_call.1']
    #allocation7 [shape = 'u8[270336]{0}', space=vmem, size = 0x42000, scoped, tag = 'output window, operand 0']
    %10 = vsyncpa [#allocation5], 0
    %s11 = scalar_lea.sflag [#allocation5], 1
    %12 = vsyncpa %s11, 0
    %13 = vsyncpa [#allocation6], 0
    %s14 = scalar_lea.sflag [#allocation6], 1
    %15 = vsyncpa %s14, 0
    loop: start=0, step=1, limit=4
    $region2: #{tpu_custom_call.1} parent=1 // loop_pre_header
      _
    $region3: #{tpu_custom_call.1} parent=1 // loop_header
      %s17 = sphi 0, %s21
      %p18 = scmp.ge.s32.totalorder %s17, 4
      %s25 = sphi 0, %s25
      %s27 = sphi 0, %s25
      %s28 = sphi 0, %s27
      %s42 = sphi 0, %s28
      %s46 = sphi 0, %s46
      %s48 = sphi 0, %s46
      %s49 = sphi 0, %s48
      %s63 = sphi 0, %s49
      %s69 = sphi 0, %s71
      %s72 = sphi 0, %s69
      %s73 = sphi 0, %s72
      %s89 = sphi 0, %s73
      %s95 = sphi 0, %s97
      %s98 = sphi 0, %s95
      %s99 = sphi 0, %s98
      %s115 = sphi 0, %s99
    $region4: #{tpu_custom_call.1} parent=1 // loop_header_branch
      %20 = sbr.rel (%p18) target = $region8
    $region5: #{tpu_custom_call.1} parent=1 // loop_body
      %s22 = ssub.s32 %s17, 1
      %s23 = ssub.s32 %s17, 2
      %s24 = sadd.s32 %s17, 1
      %s26 = sadd.s32 %s25, 1
      %p29 = scmp.eq.s32.totalorder %s17, 1
      %p30 = scmp.ne.s32.totalorder %s25, %s27
      %p31 = scmp.eq.s32.totalorder %s17, 0
      %p32 = por %p30, %p31
      %p33 = scmp.ne.s32.totalorder %s25, %s27
      %p34 = scmp.eq.s32.totalorder %s22, 1
      %p35 = por %p33, %p34
      %p36 = scmp.ne.s32.totalorder %s27, %s28
      %p37 = scmp.eq.s32.totalorder %s22, 0
      %p38 = por %p36, %p37
      %p39 = scmp.ne.s32.totalorder %s27, %s28
      %p40 = scmp.eq.s32.totalorder %s23, 1
      %p41 = por %p39, %p40
      %p43 = scmp.ne.s32.totalorder %s28, %s42
      %p44 = scmp.eq.s32.totalorder %s23, 0
      %p45 = por %p43, %p44
      %s47 = sadd.s32 %s46, 1
      %p50 = scmp.eq.s32.totalorder %s17, 1
      %p51 = scmp.ne.s32.totalorder %s46, %s48
      %p52 = scmp.eq.s32.totalorder %s17, 0
      %p53 = por %p51, %p52
      %p54 = scmp.ne.s32.totalorder %s46, %s48
      %p55 = scmp.eq.s32.totalorder %s22, 1
      %p56 = por %p54, %p55
      %p57 = scmp.ne.s32.totalorder %s48, %s49
      %p58 = scmp.eq.s32.totalorder %s22, 0
      %p59 = por %p57, %p58
      %p60 = scmp.ne.s32.totalorder %s48, %s49
      %p61 = scmp.eq.s32.totalorder %s23, 1
      %p62 = por %p60, %p61
      %p64 = scmp.ne.s32.totalorder %s49, %s63
      %p65 = scmp.eq.s32.totalorder %s23, 0
      %p66 = por %p64, %p65
      %s67 = ssub.s32 %s17, %s24
      %p68 = scmp.eq.s32.totalorder %s67, 0
      %s70 = sadd.s32 %s69, 1
      %s71 = scalar_select %p68, %s69, %s70
      %p74 = pneg %p68
      %p75 = scmp.eq.s32.totalorder %s17, 1
      %p76 = por %p74, %p75
      %p77 = scmp.ne.s32.totalorder %s69, %s72
      %p78 = scmp.eq.s32.totalorder %s17, 0
      %p79 = por %p77, %p78
      %p80 = scmp.ne.s32.totalorder %s69, %s72
      %p81 = scmp.eq.s32.totalorder %s22, 1
      %p82 = por %p80, %p81
      %p83 = scmp.ne.s32.totalorder %s72, %s73
      %p84 = scmp.eq.s32.totalorder %s22, 0
      %p85 = por %p83, %p84
      %p86 = scmp.ne.s32.totalorder %s72, %s73
      %p87 = scmp.eq.s32.totalorder %s23, 1
      %p88 = por %p86, %p87
      %p90 = scmp.ne.s32.totalorder %s73, %s89
      %p91 = scmp.eq.s32.totalorder %s23, 0
      %p92 = por %p90, %p91
      %s93 = ssub.s32 %s17, %s24
      %p94 = scmp.eq.s32.totalorder %s93, 0
      %s96 = sadd.s32 %s95, 1
      %s97 = scalar_select %p94, %s95, %s96
      %p100 = pneg %p94
      %p101 = scmp.eq.s32.totalorder %s17, 1
      %p102 = por %p100, %p101
      %p103 = scmp.ne.s32.totalorder %s95, %s98
      %p104 = scmp.eq.s32.totalorder %s17, 0
      %p105 = por %p103, %p104
      %p106 = scmp.ne.s32.totalorder %s95, %s98
      %p107 = scmp.eq.s32.totalorder %s22, 1
      %p108 = por %p106, %p107
      %p109 = scmp.ne.s32.totalorder %s98, %s99
      %p110 = scmp.eq.s32.totalorder %s22, 0
      %p111 = por %p109, %p110
      %p112 = scmp.ne.s32.totalorder %s98, %s99
      %p113 = scmp.eq.s32.totalorder %s23, 1
      %p114 = por %p112, %p113
      %p116 = scmp.ne.s32.totalorder %s99, %s115
      %p117 = scmp.eq.s32.totalorder %s23, 0
      %p118 = por %p116, %p117
      %p119 = scmp.le.s32.totalorder 1, %s17
      %p120 = scmp.lt.s32.totalorder %s17, 3
      %p121 = pnand %p119, %p120
      %p122 = pneg %p121
      // Predicated region
      $region9: #{tpu_custom_call.1} parent=5 // pred_check
        _
      $region10: #{tpu_custom_call.1} parent=5 // pred_check_branch
        %124 = sbr.rel (%p121) target = $region12
      $region11: #{tpu_custom_call.1} parent=5 // pred_region
        %s125 = ssub.s32 %s17, 1
        // Predicated region
        $region13: #{tpu_custom_call.1} parent=11 // pred_check
          %p126 = pneg %p38
        $region14: #{tpu_custom_call.1} parent=11 // pred_check_branch
          %128 = sbr.rel (%p126) target = $region16
        $region15: #{tpu_custom_call.1} parent=11 // pred_region
          _
        $region16: #{tpu_custom_call.1} parent=11 // pred_fallthru
          _
        // Predicated region
        $region17: #{tpu_custom_call.1} parent=11 // pred_check
          %p129 = pneg %p59
        $region18: #{tpu_custom_call.1} parent=11 // pred_check_branch
          %131 = sbr.rel (%p129) target = $region20
        $region19: #{tpu_custom_call.1} parent=11 // pred_region
          _
        $region20: #{tpu_custom_call.1} parent=11 // pred_fallthru
          _
      $region12: #{tpu_custom_call.1} parent=5 // pred_fallthru
        _
      %p132 = scmp.lt.s32.totalorder %s17, 2
      // Predicated region
      $region21: #{tpu_custom_call.1} parent=5 // pred_check
        %p133 = pneg %p132
      $region22: #{tpu_custom_call.1} parent=5 // pred_check_branch
        %135 = sbr.rel (%p133) target = $region24
      $region23: #{tpu_custom_call.1} parent=5 // pred_region
        // Predicated region
        $region25: #{tpu_custom_call.1} parent=23 // pred_check
          %p136 = pneg %p79
        $region26: #{tpu_custom_call.1} parent=23 // pred_check_branch
          %138 = sbr.rel (%p136) target = $region28
        $region27: #{tpu_custom_call.1} parent=23 // pred_region
          %s139 = sand.u32 %s69, 1
          %s140 = scalar_lea.sflag [#allocation5], %s139
          %s141 = sand.u32 %s69, 1
          %s142 = smul.addr %s141, 264
          %s143 = scalar_lea.vmem [#allocation4], %s142
          %s144 = smul.u32 33, %s17
          %s145 = ssub.s32 65, %s144
          %p146 = scmp.lt.s32.totalorder %s145, 33
          %s147 = scalar_select %p146, %s145, 33
          %s148 = smul.u32 128, %s147
          %s150 = ssub.s32 4224, %s148
          %151 = vsyncadd %s140, %s150
          %p152 = scmp.ne.s32.totalorder 0, %s148
          %s153 = smul.addr %s144, 128
          %s154 = scalar_lea.hbm %s2, %s153
          %s155 = smul.u32 8, %s147
          %s156 = sshll.u32 %s143, 4
          %s157 = int_to_ptr.vmem [resolvable:$true] %s156
          %s158 = sshll.u32 %s155, 4
          %162 = dma.hbm_to_vmem [thread:$0]  (%p152), %s154, %s158, %s157, %s140, 128, 128, 8
        $region28: #{tpu_custom_call.1} parent=23 // pred_fallthru
          _
      $region24: #{tpu_custom_call.1} parent=5 // pred_fallthru
        _
      %p163 = scmp.le.s32.totalorder 1, %s17
      %p164 = scmp.lt.s32.totalorder %s17, 3
      %p165 = pnand %p163, %p164
      %p166 = pneg %p165
      // Predicated region
      $region29: #{tpu_custom_call.1} parent=5 // pred_check
        _
      $region30: #{tpu_custom_call.1} parent=5 // pred_check_branch
        %168 = sbr.rel (%p165) target = $region32
      $region31: #{tpu_custom_call.1} parent=5 // pred_region
        %s169 = ssub.s32 %s17, 1
        %s170 = sand.u32 %s72, 1
        %s171 = scalar_lea.sflag [#allocation5], %s170
        %s172 = sand.u32 %s72, 1
        %s173 = smul.addr %s172, 264
        %s174 = scalar_lea.vmem [#allocation4], %s173
        // Predicated region
        $region33: #{tpu_custom_call.1} parent=31 // pred_check
          %p175 = pneg %p85
        $region34: #{tpu_custom_call.1} parent=31 // pred_check_branch
          %177 = sbr.rel (%p175) target = $region36
        $region35: #{tpu_custom_call.1} parent=31 // pred_region
          %178 = dma.done %s171, 4224
        $region36: #{tpu_custom_call.1} parent=31 // pred_fallthru
          _
        %p179 = pneg %p38
        %p180 = pneg %p35
        %p181 = pneg %p59
        %p182 = pneg %p56
        %s183 = sand.u32 %s72, 1
        %s184 = scalar_lea.sflag [#allocation5], %s183
        %s185 = sand.u32 %s72, 1
        %s186 = smul.addr %s185, 264
        %s187 = scalar_lea.vmem [#allocation4], %s186
        %p188 = pneg %p85
        %p189 = pneg %p82
        %p190 = pneg %p111
        %p191 = pneg %p108
        %s192 = sand.u32 %s98, 1
        %s193 = scalar_lea.sflag [#allocation6], %s192
        %s194 = sand.u32 %s98, 1
        %s195 = smul.addr %s194, 264
        %s196 = scalar_lea.vmem [#allocation7], %s195
        %s197 = smul.u32 33, %s22
        %s198 = ssub.s32 65, %s197
        %p199 = scmp.lt.s32.totalorder %s198, 33
        %s200 = scalar_select %p199, %s198, 33
        %s201 = smul.u32 128, %s200
        %s202 = smul.u32 33, %s22
        %s203 = ssub.s32 65, %s202
        %p204 = scmp.lt.s32.totalorder %s203, 33
        %s205 = scalar_select %p204, %s203, 33
        %s206 = smul.u32 128, %s205
        %s207 = sld [smem:[#allocation2]]
        %v208 = vld [vmem:[%s174] sm:$0xff]
        %v209 = vld [vmem:[%s174 + $0x8] sm:$0xff]
        %v210 = vld [vmem:[%s174 + $0x10] sm:$0xff]
        %v211 = vld [vmem:[%s174 + $0x18] sm:$0xff]
        %v212 = vld [vmem:[%s174 + $0x20] sm:$0xff]
        %v213 = vld [vmem:[%s174 + $0x28] sm:$0xff]
        %v214 = vld [vmem:[%s174 + $0x30] sm:$0xff]
        %v215 = vld [vmem:[%s174 + $0x38] sm:$0xff]
        %v216 = vld [vmem:[%s174 + $0x40] sm:$0xff]
        %v217 = vld [vmem:[%s174 + $0x48] sm:$0xff]
        %v218 = vld [vmem:[%s174 + $0x50] sm:$0xff]
        %v219 = vld [vmem:[%s174 + $0x58] sm:$0xff]
        %v220 = vld [vmem:[%s174 + $0x60] sm:$0xff]
        %v221 = vld [vmem:[%s174 + $0x68] sm:$0xff]
        %v222 = vld [vmem:[%s174 + $0x70] sm:$0xff]
        %v223 = vld [vmem:[%s174 + $0x78] sm:$0xff]
        %v224 = vld [vmem:[%s174 + $0x80] sm:$0xff]
        %v225 = vld [vmem:[%s174 + $0x88] sm:$0xff]
        %v226 = vld [vmem:[%s174 + $0x90] sm:$0xff]
        %v227 = vld [vmem:[%s174 + $0x98] sm:$0xff]
        %v228 = vld [vmem:[%s174 + $0xa0] sm:$0xff]
        %v229 = vld [vmem:[%s174 + $0xa8] sm:$0xff]
        %v230 = vld [vmem:[%s174 + $0xb0] sm:$0xff]
        %v231 = vld [vmem:[%s174 + $0xb8] sm:$0xff]
        %v232 = vld [vmem:[%s174 + $0xc0] sm:$0xff]
        %v233 = vld [vmem:[%s174 + $0xc8] sm:$0xff]
        %v234 = vld [vmem:[%s174 + $0xd0] sm:$0xff]
        %v235 = vld [vmem:[%s174 + $0xd8] sm:$0xff]
        %v236 = vld [vmem:[%s174 + $0xe0] sm:$0xff]
        %v237 = vld [vmem:[%s174 + $0xe8] sm:$0xff]
        %v238 = vld [vmem:[%s174 + $0xf0] sm:$0xff]
        %v239 = vld [vmem:[%s174 + $0xf8] sm:$0xff]
        %v240 = vld [vmem:[%s174 + $0x100] sm:$0xff]
        %v241 = vstv %s207
        %v242 = vmul.f32 %v241, %v208
        %v243 = vmul.f32 %v241, %v209
        %v244 = vmul.f32 %v241, %v210
        %v245 = vmul.f32 %v241, %v211
        %v246 = vmul.f32 %v241, %v212
        %v247 = vmul.f32 %v241, %v213
        %v248 = vmul.f32 %v241, %v214
        %v249 = vmul.f32 %v241, %v215
        %v250 = vmul.f32 %v241, %v216
        %v251 = vmul.f32 %v241, %v217
        %v252 = vmul.f32 %v241, %v218
        %v253 = vmul.f32 %v241, %v219
        %v254 = vmul.f32 %v241, %v220
        %v255 = vmul.f32 %v241, %v221
        %v256 = vmul.f32 %v241, %v222
        %v257 = vmul.f32 %v241, %v223
        %v258 = vmul.f32 %v241, %v224
        %v259 = vmul.f32 %v241, %v225
        %v260 = vmul.f32 %v241, %v226
        %v261 = vmul.f32 %v241, %v227
        %v262 = vmul.f32 %v241, %v228
        %v263 = vmul.f32 %v241, %v229
        %v264 = vmul.f32 %v241, %v230
        %v265 = vmul.f32 %v241, %v231
        %v266 = vmul.f32 %v241, %v232
        %v267 = vmul.f32 %v241, %v233
        %v268 = vmul.f32 %v241, %v234
        %v269 = vmul.f32 %v241, %v235
        %v270 = vmul.f32 %v241, %v236
        %v271 = vmul.f32 %v241, %v237
        %v272 = vmul.f32 %v241, %v238
        %v273 = vmul.f32 %v241, %v239
        %v274 = vmul.f32 %v241, %v240
        %s275 = sld [smem:[#allocation3]]
        %v276 = vstv %s275
        %v277 = vadd.f32 %v242, %v276
        %v278 = vadd.f32 %v243, %v276
        %v279 = vadd.f32 %v244, %v276
        %v280 = vadd.f32 %v245, %v276
        %v281 = vadd.f32 %v246, %v276
        %v282 = vadd.f32 %v247, %v276
        %v283 = vadd.f32 %v248, %v276
        %v284 = vadd.f32 %v249, %v276
        %v285 = vadd.f32 %v250, %v276
        %v286 = vadd.f32 %v251, %v276
        %v287 = vadd.f32 %v252, %v276
        %v288 = vadd.f32 %v253, %v276
        %v289 = vadd.f32 %v254, %v276
        %v290 = vadd.f32 %v255, %v276
        %v291 = vadd.f32 %v256, %v276
        %v292 = vadd.f32 %v257, %v276
        %v293 = vadd.f32 %v258, %v276
        %v294 = vadd.f32 %v259, %v276
        %v295 = vadd.f32 %v260, %v276
        %v296 = vadd.f32 %v261, %v276
        %v297 = vadd.f32 %v262, %v276
        %v298 = vadd.f32 %v263, %v276
        %v299 = vadd.f32 %v264, %v276
        %v300 = vadd.f32 %v265, %v276
        %v301 = vadd.f32 %v266, %v276
        %v302 = vadd.f32 %v267, %v276
        %v303 = vadd.f32 %v268, %v276
        %v304 = vadd.f32 %v269, %v276
        %v305 = vadd.f32 %v270, %v276
        %v306 = vadd.f32 %v271, %v276
        %v307 = vadd.f32 %v272, %v276
        %v308 = vadd.f32 %v273, %v276
        %v309 = vadd.f32 %v274, %v276
        %310 = vst [vmem:[%s196] sm:$0xff] %v277
        %311 = vst [vmem:[%s196 + $0x8] sm:$0xff] %v278
        %312 = vst [vmem:[%s196 + $0x10] sm:$0xff] %v279
        %313 = vst [vmem:[%s196 + $0x18] sm:$0xff] %v280
        %314 = vst [vmem:[%s196 + $0x20] sm:$0xff] %v281
        %315 = vst [vmem:[%s196 + $0x28] sm:$0xff] %v282
        %316 = vst [vmem:[%s196 + $0x30] sm:$0xff] %v283
        %317 = vst [vmem:[%s196 + $0x38] sm:$0xff] %v284
        %318 = vst [vmem:[%s196 + $0x40] sm:$0xff] %v285
        %319 = vst [vmem:[%s196 + $0x48] sm:$0xff] %v286
        %320 = vst [vmem:[%s196 + $0x50] sm:$0xff] %v287
        %321 = vst [vmem:[%s196 + $0x58] sm:$0xff] %v288
        %322 = vst [vmem:[%s196 + $0x60] sm:$0xff] %v289
        %323 = vst [vmem:[%s196 + $0x68] sm:$0xff] %v290
        %324 = vst [vmem:[%s196 + $0x70] sm:$0xff] %v291
        %325 = vst [vmem:[%s196 + $0x78] sm:$0xff] %v292
        %326 = vst [vmem:[%s196 + $0x80] sm:$0xff] %v293
        %327 = vst [vmem:[%s196 + $0x88] sm:$0xff] %v294
        %328 = vst [vmem:[%s196 + $0x90] sm:$0xff] %v295
        %329 = vst [vmem:[%s196 + $0x98] sm:$0xff] %v296
        %330 = vst [vmem:[%s196 + $0xa0] sm:$0xff] %v297
        %331 = vst [vmem:[%s196 + $0xa8] sm:$0xff] %v298
        %332 = vst [vmem:[%s196 + $0xb0] sm:$0xff] %v299
        %333 = vst [vmem:[%s196 + $0xb8] sm:$0xff] %v300
        %334 = vst [vmem:[%s196 + $0xc0] sm:$0xff] %v301
        %335 = vst [vmem:[%s196 + $0xc8] sm:$0xff] %v302
        %336 = vst [vmem:[%s196 + $0xd0] sm:$0xff] %v303
        %337 = vst [vmem:[%s196 + $0xd8] sm:$0xff] %v304
        %338 = vst [vmem:[%s196 + $0xe0] sm:$0xff] %v305
        %339 = vst [vmem:[%s196 + $0xe8] sm:$0xff] %v306
        %340 = vst [vmem:[%s196 + $0xf0] sm:$0xff] %v307
        %341 = vst [vmem:[%s196 + $0xf8] sm:$0xff] %v308
        %342 = vst [vmem:[%s196 + $0x100] sm:$0xff] %v309
        %s343 = sand.u32 %s98, 1
        %s344 = scalar_lea.sflag [#allocation6], %s343
        %s345 = sand.u32 %s98, 1
        %s346 = smul.addr %s345, 264
        %s347 = scalar_lea.vmem [#allocation7], %s346
        // Predicated region
        $region37: #{tpu_custom_call.1} parent=31 // pred_check
          %p348 = pneg %p108
        $region38: #{tpu_custom_call.1} parent=31 // pred_check_branch
          %350 = sbr.rel (%p348) target = $region40
        $region39: #{tpu_custom_call.1} parent=31 // pred_region
          %s351 = smul.u32 33, %s22
          %s352 = ssub.s32 65, %s351
          %p353 = scmp.lt.s32.totalorder %s352, 33
          %s354 = scalar_select %p353, %s352, 33
          %s355 = smul.u32 128, %s354
          %s357 = ssub.s32 4224, %s355
          %358 = vsyncadd %s344, %s357
          %p359 = scmp.ne.s32.totalorder 0, %s355
          %s360 = smul.addr %s351, 128
          %s361 = scalar_lea.hbm %s3, %s360
          %s362 = smul.u32 8, %s354
          %s363 = sshll.u32 %s347, 4
          %s364 = int_to_ptr.vmem [resolvable:$true] %s363
          %s365 = sshll.u32 %s362, 4
          %369 = dma.vmem_to_hbm [thread:$0]  (%p359), %s364, %s365, %s361, %s344, 128, 128, 8
        $region40: #{tpu_custom_call.1} parent=31 // pred_fallthru
          _
      $region32: #{tpu_custom_call.1} parent=5 // pred_fallthru
        _
      %p370 = scmp.le.s32.totalorder 2, %s17
      // Predicated region
      $region41: #{tpu_custom_call.1} parent=5 // pred_check
        %p371 = pneg %p370
      $region42: #{tpu_custom_call.1} parent=5 // pred_check_branch
        %373 = sbr.rel (%p371) target = $region44
      $region43: #{tpu_custom_call.1} parent=5 // pred_region
        %s374 = ssub.s32 %s17, 2
        // Predicated region
        $region45: #{tpu_custom_call.1} parent=43 // pred_check
          %p375 = pneg %p114
        $region46: #{tpu_custom_call.1} parent=43 // pred_check_branch
          %377 = sbr.rel (%p375) target = $region48
        $region47: #{tpu_custom_call.1} parent=43 // pred_region
          %s378 = sand.u32 %s99, 1
          %s379 = scalar_lea.sflag [#allocation6], %s378
          %s380 = sand.u32 %s99, 1
          %s381 = smul.addr %s380, 264
          %s382 = scalar_lea.vmem [#allocation7], %s381
          %383 = dma.done %s379, 4224
        $region48: #{tpu_custom_call.1} parent=43 // pred_fallthru
          _
      $region44: #{tpu_custom_call.1} parent=5 // pred_fallthru
        _
    $region6: #{tpu_custom_call.1} parent=1 // loop_footer
      %s21 = sadd.s32 1, %s17
    $region7: #{tpu_custom_call.1} parent=1 // loop_footer_branch
      %16 = sbr.rel target = $region3
    $region8: #{tpu_custom_call.1} parent=1 // loop_exit
      _
    %384 = vsyncpa [#allocation5], 1
    %s385 = scalar_lea.sflag [#allocation5], 1
    %386 = vsyncpa %s385, 1
    %387 = vsyncpa [#allocation6], 1
    %s388 = scalar_lea.sflag [#allocation6], 1
    %389 = vsyncpa %s388, 1

</llo_original>
